<compile_context>
chip_gen: v6e
topology: v6e:2x2x1
jax: 0.10.0
libtpu: 0.0.40
codegen_flags: <defaults>
</compile_context>

<pallas_src>
import functools
import math

import jax
import jax.numpy as jnp
from jax.experimental import pallas as pl
from jax.experimental.pallas import tpu as pltpu

# TODO(synk): nn.Dropout layers are identity at inference; no stochastic dropout.
# TODO(synk): decoder cross-attention, head_mask, output_attentions and the
#             non-standard pet_type variants (maskbert/diff/bitfit/adapters/lora)
#             are not implemented — standard encoder inference path only.
# TODO(synk): for very long S on v7x, add a q-block grid axis to the attention
#             kernel; the per-head loop already bounds live scores to S*S*4 bytes.
# TODO(synk): stretch goal — fuse the QKV projection into the attention kernel
#             (Wqkv grid-invariant) to remove the (M,3H) HBM round trip entirely.

LAYER_NORM_EPS = 1e-12


# --------------------------------------------------------------------------- #
# Small helpers
# --------------------------------------------------------------------------- #
def _round_up(x, m):
    return (x + m - 1) // m * m


def _row_tiles(M, block_rows):
    assert block_rows % 8 == 0, "block_rows must be a multiple of 8"
    tm = min(block_rows, _round_up(M, 8))
    Mp = _round_up(M, tm)
    return tm, Mp


def _pad_rows(x2d, Mp):
    M = x2d.shape[0]
    if Mp == M:
        return x2d
    return jnp.pad(x2d, ((0, Mp - M), (0, 0)))


def _gelu_tanh(y):
    # TODO(synk): HF ACT2FN['gelu'] for BERT is the exact erf GELU; Mosaic-safe tanh
    #             approximation used here (small systematic numeric difference).
    c = math.sqrt(2.0 / math.pi)
    return 0.5 * y * (1.0 + jnp.tanh(c * (y + 0.044715 * y * y * y)))


@functools.lru_cache(maxsize=None)
def _vmem_capacity_bytes():
    try:
        info = pltpu.get_tpu_info()
        return int(getattr(info, "vmem_capacity_bytes"))
    except Exception:
        return None


def _default_block_rows():
    cap = _vmem_capacity_bytes()
    # 512-row tiles reach ~85% of HBM roofline on 128 MiB-VMEM chips (v5e/v6e);
    # stay at 256 on v7x's 64 MiB budget.
    if cap is not None and cap >= 100 * (1 << 20):
        return 512
    return 256


def _default_vmem_limit():
    cap = _vmem_capacity_bytes()
    if cap is None:
        return None
    return int(cap * 3 // 4)


@functools.lru_cache(maxsize=None)
def _single_buffering_supported() -> bool:
    """Probe once whether pipeline_mode=pl.Buffered(1) is accepted on this jax/TPU."""
    try:
        def k(x_ref, c_ref, o_ref):
            o_ref[...] = x_ref[...] + c_ref[...]

        x = jnp.zeros((16, 128), jnp.float32)
        c = jnp.ones((8, 128), jnp.float32)
        out = pl.pallas_call(
            k,
            out_shape=jax.ShapeDtypeStruct((16, 128), jnp.float32),
            grid=(2,),
            in_specs=[
                pl.BlockSpec((8, 128), lambda i: (i, 0)),
                pl.BlockSpec((8, 128), lambda i: (0, 0),
                             pipeline_mode=pl.Buffered(1)),
            ],
            out_specs=pl.BlockSpec((8, 128), lambda i: (i, 0)),
        )(x, c)
        jax.block_until_ready(out)
        return True
    except Exception:
        return False


def _const_spec(block_shape):
    """BlockSpec for a grid-invariant operand; single-buffered when supported."""
    n = len(block_shape)
    index_map = lambda i: (0,) * n
    if _single_buffering_supported():
        return pl.BlockSpec(block_shape, index_map, pipeline_mode=pl.Buffered(1))
    return pl.BlockSpec(block_shape, index_map)


def _mosaic_params(vmem_limit_bytes):
    return pltpu.CompilerParams(dimension_semantics=("parallel",),
                                vmem_limit_bytes=vmem_limit_bytes)


# --------------------------------------------------------------------------- #
# Kernels
# --------------------------------------------------------------------------- #
def _linear_kernel(x_ref, wt_ref, b_ref, o_ref):
    # x_ref: (tm, K)  wt_ref: (K, N)  b_ref: (1, N)  o_ref: (tm, N)
    y = jnp.dot(x_ref[...], wt_ref[...], preferred_element_type=jnp.float32)
    y = y + b_ref[...].astype(jnp.float32)
    o_ref[...] = y.astype(o_ref.dtype)


def _attention_kernel(qkv_ref, mask_ref, o_ref, *, num_heads, head_dim, scale):
    # qkv_ref: (1, S, 3H) lane-dense   mask_ref: (1, mq, S) additive (mq in {1, S})
    # o_ref:   (1, S, H)  lane-dense
    H = num_heads * head_dim
    for h in range(num_heads):          # static unroll: one head's scores live at a time
        lo = h * head_dim
        q = qkv_ref[0, :, lo:lo + head_dim]                    # (S, D)
        k = qkv_ref[0, :, H + lo:H + lo + head_dim]            # (S, D)
        v = qkv_ref[0, :, 2 * H + lo:2 * H + lo + head_dim]    # (S, D)
        s = jax.lax.dot_general(q, k, (((1,), (1,)), ((), ())),
                                preferred_element_type=jnp.float32)   # (S, S)
        s = s * scale + mask_ref[0].astype(jnp.float32)        # broadcasts over q rows
        m = jnp.max(s, axis=-1, keepdims=True)
        p = jnp.exp(s - m)
        denom = jnp.sum(p, axis=-1, keepdims=True)
        r = pl.reciprocal(denom, approx=True)                  # EUP slot, not VPU divide
        r = r * (2.0 - denom * r)                              # one Newton step -> f32 accuracy
        p = p * r
        ctx = jnp.dot(p.astype(v.dtype), v,
                      preferred_element_type=jnp.float32)       # (S, D)
        o_ref[0, :, lo:lo + head_dim] = ctx.astype(o_ref.dtype)


def _dense_residual_ln_kernel(x_ref, wt_ref, b_ref, res_ref, g_ref, beta_ref,
                              o_ref, *, eps, n_inv):
    # LN(x @ W.T + b + residual), f32 math, biased variance (PyTorch semantics).
    y = jnp.dot(x_ref[...], wt_ref[...], preferred_element_type=jnp.float32)
    z = y + b_ref[...].astype(jnp.float32) + res_ref[...].astype(jnp.float32)
    s = jnp.sum(z, axis=-1, keepdims=True)
    sq = jnp.sum(z * z, axis=-1, keepdims=True)
    mean = s * n_inv
    var = jnp.maximum(sq * n_inv - mean * mean, 0.0)           # clamp: no rsqrt(neg) NaN
    inv = jax.lax.rsqrt(var + eps)
    out = (z - mean) * inv * g_ref[...].astype(jnp.float32) \
        + beta_ref[...].astype(jnp.float32)
    o_ref[...] = out.astype(o_ref.dtype)


def _ffn_ln_kernel(x_ref, wi_ref, bi_ref, w2_ref, b2_ref, g_ref, beta_ref,
                   o_ref, *, eps, n_inv):
    # LN(gelu(x @ Wi.T + bi) @ W2.T + b2 + x); the (tm, I) activation stays in VMEM.
    x = x_ref[...]
    h = jnp.dot(x, wi_ref[...], preferred_element_type=jnp.float32)
    h = _gelu_tanh(h + bi_ref[...].astype(jnp.float32))
    y = jnp.dot(h.astype(w2_ref.dtype), w2_ref[...],
                preferred_element_type=jnp.float32)
    z = y + b2_ref[...].astype(jnp.float32) + x.astype(jnp.float32)
    s = jnp.sum(z, axis=-1, keepdims=True)
    sq = jnp.sum(z * z, axis=-1, keepdims=True)
    mean = s * n_inv
    var = jnp.maximum(sq * n_inv - mean * mean, 0.0)
    inv = jax.lax.rsqrt(var + eps)
    out = (z - mean) * inv * g_ref[...].astype(jnp.float32) \
        + beta_ref[...].astype(jnp.float32)
    o_ref[...] = out.astype(o_ref.dtype)


# --------------------------------------------------------------------------- #
# Pallas-call wrappers
# --------------------------------------------------------------------------- #
def _linear(x2d, wt, b, *, block_rows, out_dtype, vmem_limit_bytes):
    M, K = x2d.shape
    Kw, N = wt.shape
    assert K == Kw
    if x2d.dtype != wt.dtype:
        x2d = x2d.astype(wt.dtype)
    tm, Mp = _row_tiles(M, block_rows)
    xp = _pad_rows(x2d, Mp)
    b2d = b.reshape(1, N).astype(jnp.float32)

    nbytes = lambda a: a.size * a.dtype.itemsize
    cost = pl.CostEstimate(
        flops=2 * Mp * K * N,
        transcendentals=0,
        bytes_accessed=nbytes(xp) + nbytes(wt) + nbytes(b2d)
        + Mp * N * jnp.dtype(out_dtype).itemsize)

    out = pl.pallas_call(
        _linear_kernel,
        out_shape=jax.ShapeDtypeStruct((Mp, N), out_dtype),
        grid_spec=pltpu.PrefetchScalarGridSpec(
            num_scalar_prefetch=0,
            grid=(Mp // tm,),
            in_specs=[
                pl.BlockSpec((tm, K), lambda i: (i, 0)),   # activation rows
                _const_spec((K, N)),                       # W.T (grid-invariant)
                _const_spec((1, N)),                       # bias
            ],
            out_specs=pl.BlockSpec((tm, N), lambda i: (i, 0)),
        ),
        compiler_params=_mosaic_params(vmem_limit_bytes),
        cost_estimate=cost,
    )(xp, wt, b2d)
    return out[:M] if Mp != M else out


def _attention(qkv3, mask3, *, num_heads, head_dim, scale, out_dtype,
               vmem_limit_bytes):
    B, S, threeH = qkv3.shape
    H = num_heads * head_dim
    assert threeH == 3 * H
    mq = mask3.shape[1]
    nbytes = lambda a: a.size * a.dtype.itemsize
    cost = pl.CostEstimate(
        flops=4 * B * num_heads * S * S * head_dim,
        transcendentals=B * num_heads * S * S,
        bytes_accessed=nbytes(qkv3) + nbytes(mask3)
        + B * S * H * jnp.dtype(out_dtype).itemsize)

    return pl.pallas_call(
        functools.partial(_attention_kernel, num_heads=num_heads,
                          head_dim=head_dim, scale=scale),
        out_shape=jax.ShapeDtypeStruct((B, S, H), out_dtype),
        grid_spec=pltpu.PrefetchScalarGridSpec(
            num_scalar_prefetch=0,
            grid=(B,),
            in_specs=[
                pl.BlockSpec((1, S, 3 * H), lambda b: (b, 0, 0)),   # lane-dense qkv
                pl.BlockSpec((1, mq, S), lambda b: (b, 0, 0)),      # additive mask
            ],
            out_specs=pl.BlockSpec((1, S, H), lambda b: (b, 0, 0)),  # lane-dense ctx
        ),
        compiler_params=_mosaic_params(vmem_limit_bytes),
        cost_estimate=cost,
    )(qkv3, mask3)


def _dense_residual_layernorm(x2d, wt, b, res2d, gamma, beta, *, eps, block_rows,
                              out_dtype, vmem_limit_bytes):
    M, K = x2d.shape
    Kw, N = wt.shape
    assert K == Kw and res2d.shape == (M, N)
    if x2d.dtype != wt.dtype:
        x2d = x2d.astype(wt.dtype)
    tm, Mp = _row_tiles(M, block_rows)
    xp = _pad_rows(x2d, Mp)
    rp = _pad_rows(res2d, Mp)
    b2d = b.reshape(1, N).astype(jnp.float32)
    g2d = gamma.reshape(1, N).astype(jnp.float32)
    be2d = beta.reshape(1, N).astype(jnp.float32)

    nbytes = lambda a: a.size * a.dtype.itemsize
    cost = pl.CostEstimate(
        flops=2 * Mp * K * N + 10 * Mp * N,
        transcendentals=Mp,
        bytes_accessed=nbytes(xp) + nbytes(wt) + nbytes(rp) + 3 * N * 4
        + Mp * N * jnp.dtype(out_dtype).itemsize)

    out = pl.pallas_call(
        functools.partial(_dense_residual_ln_kernel, eps=eps, n_inv=1.0 / N),
        out_shape=jax.ShapeDtypeStruct((Mp, N), out_dtype),
        grid_spec=pltpu.PrefetchScalarGridSpec(
            num_scalar_prefetch=0,
            grid=(Mp // tm,),
            in_specs=[
                pl.BlockSpec((tm, K), lambda i: (i, 0)),   # activation rows
                _const_spec((K, N)),                       # W.T
                _const_spec((1, N)),                       # bias
                pl.BlockSpec((tm, N), lambda i: (i, 0)),   # residual rows
                _const_spec((1, N)),                       # gamma
                _const_spec((1, N)),                       # beta
            ],
            out_specs=pl.BlockSpec((tm, N), lambda i: (i, 0)),
        ),
        compiler_params=_mosaic_params(vmem_limit_bytes),
        cost_estimate=cost,
    )(xp, wt, b2d, rp, g2d, be2d)
    return out[:M] if Mp != M else out


def _ffn_layernorm(x2d, wi_t, bi, w2_t, b2, gamma, beta, *, eps, block_rows,
                   out_dtype, vmem_limit_bytes):
    M, H = x2d.shape
    Hi, I = wi_t.shape
    I2, H2 = w2_t.shape
    assert H == Hi and I == I2 and H == H2
    if x2d.dtype != wi_t.dtype:
        x2d = x2d.astype(wi_t.dtype)
    tm, Mp = _row_tiles(M, block_rows)
    xp = _pad_rows(x2d, Mp)
    bi2d = bi.reshape(1, I).astype(jnp.float32)
    b22d = b2.reshape(1, H).astype(jnp.float32)
    g2d = gamma.reshape(1, H).astype(jnp.float32)
    be2d = beta.reshape(1, H).astype(jnp.float32)

    nbytes = lambda a: a.size * a.dtype.itemsize
    cost = pl.CostEstimate(
        flops=4 * Mp * H * I + 12 * Mp * H,
        transcendentals=Mp * I + Mp,
        bytes_accessed=nbytes(xp) + nbytes(wi_t) + nbytes(w2_t) + (I + 3 * H) * 4
        + Mp * H * jnp.dtype(out_dtype).itemsize)

    out = pl.pallas_call(
        functools.partial(_ffn_ln_kernel, eps=eps, n_inv=1.0 / H),
        out_shape=jax.ShapeDtypeStruct((Mp, H), out_dtype),
        grid_spec=pltpu.PrefetchScalarGridSpec(
            num_scalar_prefetch=0,
            grid=(Mp // tm,),
            in_specs=[
                pl.BlockSpec((tm, H), lambda i: (i, 0)),   # attn_out rows (also residual)
                _const_spec((H, I)),                       # Wi.T
                _const_spec((1, I)),                       # bi
                _const_spec((I, H)),                       # W2.T
                _const_spec((1, H)),                       # b2
                _const_spec((1, H)),                       # gamma
                _const_spec((1, H)),                       # beta
            ],
            out_specs=pl.BlockSpec((tm, H), lambda i: (i, 0)),
        ),
        compiler_params=_mosaic_params(vmem_limit_bytes),
        cost_estimate=cost,
    )(xp, wi_t, bi2d, w2_t, b22d, g2d, be2d)
    return out[:M] if Mp != M else out


# --------------------------------------------------------------------------- #
# Parameter preparation + full layer forward
# --------------------------------------------------------------------------- #
def prepare_pet_bert_layer_params(raw, matmul_dtype=None):
    """Pre-transpose (and optionally pre-cast) weights ONCE, outside the hot path.

    `raw` holds torch-layout tensors: linear weights are (out_features, in_features).
    Q/K/V are fused into a single (H, 3H) projection. matmul_dtype=jnp.bfloat16 is the
    recommended fast path on ALL generations (v5e/v6e/v7x MXUs are bf16-native and v5e
    has the least HBM bandwidth): matmul operands and inter-kernel activations run in
    bf16 with f32 accumulation; bias / residual / LayerNorm epilogues stay f32.
    """
    _single_buffering_supported()   # warm the probe outside of any jit trace

    def wt(w):
        w = jnp.asarray(w).T        # (in, out) so kernels need no transpose
        return w.astype(matmul_dtype) if matmul_dtype is not None else w

    f32 = lambda a: jnp.asarray(a, jnp.float32)
    qkv_w = jnp.concatenate([raw["q_w"], raw["k_w"], raw["v_w"]], axis=0)
    qkv_b = jnp.concatenate([raw["q_b"], raw["k_b"], raw["v_b"]], axis=0)
    return {
        "qkv_wt": wt(qkv_w), "qkv_b": f32(qkv_b),
        "attn_out_wt": wt(raw["attn_out_w"]), "attn_out_b": f32(raw["attn_out_b"]),
        "attn_ln_g": f32(raw["attn_ln_g"]), "attn_ln_b": f32(raw["attn_ln_b"]),
        "inter_wt": wt(raw["inter_w"]), "inter_b": f32(raw["inter_b"]),
        "out_wt": wt(raw["out_w"]), "out_b": f32(raw["out_b"]),
        "out_ln_g": f32(raw["out_ln_g"]), "out_ln_b": f32(raw["out_ln_b"]),
    }


def _prepare_mask(attention_mask, B, S):
    """Normalize the additive BERT mask to (B, mq, S) with mq in {1, S}."""
    if attention_mask is None:
        return jnp.zeros((B, 1, S), jnp.float32)
    am = jnp.asarray(attention_mask, jnp.float32)
    if am.ndim == 2:                          # (B, S) key-only
        am = am.reshape(am.shape[0], 1, S)
    elif am.ndim == 4:                        # (B, 1, mq, S) extended mask
        am = am.reshape(am.shape[0], am.shape[2], S)
    elif am.ndim != 3:
        raise ValueError(f"unsupported attention_mask rank {am.ndim}")
    if am.shape[0] != B:
        am = jnp.broadcast_to(am, (B,) + am.shape[1:])
    assert am.shape[1] in (1, S), "mask query dim must be 1 (key-only) or S (full)"
    return am


def pet_bert_layer(hidden_states, attention_mask, params, *, num_heads,
                   eps=LAYER_NORM_EPS, block_rows=None, vmem_limit_bytes=None):
    """PETBertLayer forward (standard pet_type, encoder, inference).

    block_rows: row tile for the dense kernels; defaults per-generation (512 on
    v5e/v6e's 128 MiB VMEM, 256 on v7x's 64 MiB). vmem_limit_bytes defaults to 75%
    of physical VMEM. For BERT-base f32 weights at block_rows=512 either raise
    vmem_limit_bytes or use matmul_dtype=bfloat16.
    """
    B, S, H = hidden_states.shape
    assert H % num_heads == 0
    D = H // num_heads
    M = B * S
    if block_rows is None:
        block_rows = _default_block_rows()
    if vmem_limit_bytes is None:
        vmem_limit_bytes = _default_vmem_limit()

    mm_dtype = params["qkv_wt"].dtype
    out_dtype = hidden_states.dtype
    x2d = hidden_states.reshape(M, H)
    if x2d.dtype != mm_dtype:
        x2d = x2d.astype(mm_dtype)           # single cast; activations stay mm_dtype

    # Fused QKV projection: one (M,H) x (H,3H) matmul, lane-dense output.
    qkv = _linear(x2d, params["qkv_wt"], params["qkv_b"],
                  block_rows=block_rows, out_dtype=mm_dtype,
                  vmem_limit_bytes=vmem_limit_bytes)

    # Attention with lane-dense (B,S,3H)->(B,S,H) interface; head split/merge is done
    # inside the kernel (static column slices), so no XLA transposes / HBM passes.
    mask3 = _prepare_mask(attention_mask, B, S)
    ctx = _attention(qkv.reshape(B, S, 3 * H), mask3,
                     num_heads=num_heads, head_dim=D, scale=1.0 / math.sqrt(D),
                     out_dtype=mm_dtype, vmem_limit_bytes=vmem_limit_bytes)

    # PETBertSelfOutput: dense + residual + LayerNorm.
    attn_out = _dense_residual_layernorm(
        ctx.reshape(M, H), params["attn_out_wt"], params["attn_out_b"], x2d,
        params["attn_ln_g"], params["attn_ln_b"], eps=eps,
        block_rows=block_rows, out_dtype=mm_dtype,
        vmem_limit_bytes=vmem_limit_bytes)

    # PETBertIntermediate + PETBertOutput fused: GELU activation never hits HBM.
    out = _ffn_layernorm(
        attn_out, params["inter_wt"], params["inter_b"],
        params["out_wt"], params["out_b"],
        params["out_ln_g"], params["out_ln_b"], eps=eps,
        block_rows=block_rows, out_dtype=out_dtype,
        vmem_limit_bytes=vmem_limit_bytes)

    return out.reshape(B, S, H)


# --------------------------------------------------------------------------- #
# Pure-JAX reference
# --------------------------------------------------------------------------- #
def _reference_layer(hidden_states, attention_mask, raw, *, num_heads, eps):
    linear = lambda x, w, b: jnp.einsum("...k,nk->...n", x, w) + b
    B, S, H = hidden_states.shape
    D = H // num_heads
    q = linear(hidden_states, raw["q_w"], raw["q_b"])
    k = linear(hidden_states, raw["k_w"], raw["k_b"])
    v = linear(hidden_states, raw["v_w"], raw["v_b"])
    heads = lambda t: t.reshape(B, S, num_heads, D).transpose(0, 2, 1, 3)
    qh, kh, vh = heads(q), heads(k), heads(v)
    scores = jnp.einsum("bhqd,bhkd->bhqk", qh, kh) / math.sqrt(D)
    if attention_mask is not None:
        scores = scores + attention_mask
    probs = jax.nn.softmax(scores, axis=-1)
    ctx = jnp.einsum("bhqk,bhkd->bhqd", probs, vh)
    ctx = ctx.transpose(0, 2, 1, 3).reshape(B, S, H)

    def ln(z, g, b):
        mean = jnp.mean(z, axis=-1, keepdims=True)
        var = jnp.mean((z - mean) ** 2, axis=-1, keepdims=True)
        return (z - mean) * jax.lax.rsqrt(var + eps) * g + b

    attn_out = ln(linear(ctx, raw["attn_out_w"], raw["attn_out_b"]) + hidden_states,
                  raw["attn_ln_g"], raw["attn_ln_b"])
    inter = _gelu_tanh(linear(attn_out, raw["inter_w"], raw["inter_b"]))
    return ln(linear(inter, raw["out_w"], raw["out_b"]) + attn_out,
              raw["out_ln_g"], raw["out_ln_b"])


# --------------------------------------------------------------------------- #
# Demo / self-test
# --------------------------------------------------------------------------- #
if __name__ == "__main__":
    B, S = 2, 8
    HIDDEN, INTERMEDIATE, NUM_HEADS = 128, 512, 4
    EPS = 1e-12

    keys = jax.random.split(jax.random.PRNGKey(0), 18)
    nrm = lambda k, shape, s=0.02: s * jax.random.normal(k, shape, jnp.float32)
    raw = {
        "q_w": nrm(keys[0], (HIDDEN, HIDDEN)), "q_b": nrm(keys[1], (HIDDEN,)),
        "k_w": nrm(keys[2], (HIDDEN, HIDDEN)), "k_b": nrm(keys[3], (HIDDEN,)),
        "v_w": nrm(keys[4], (HIDDEN, HIDDEN)), "v_b": nrm(keys[5], (HIDDEN,)),
        "attn_out_w": nrm(keys[6], (HIDDEN, HIDDEN)),
        "attn_out_b": nrm(keys[7], (HIDDEN,)),
        "attn_ln_g": 1.0 + 0.1 * jax.random.normal(keys[8], (HIDDEN,), jnp.float32),
        "attn_ln_b": 0.1 * jax.random.normal(keys[9], (HIDDEN,), jnp.float32),
        "inter_w": nrm(keys[10], (INTERMEDIATE, HIDDEN)),
        "inter_b": nrm(keys[11], (INTERMEDIATE,)),
        "out_w": nrm(keys[12], (HIDDEN, INTERMEDIATE)),
        "out_b": nrm(keys[13], (HIDDEN,)),
        "out_ln_g": 1.0 + 0.1 * jax.random.normal(keys[14], (HIDDEN,), jnp.float32),
        "out_ln_b": 0.1 * jax.random.normal(keys[15], (HIDDEN,), jnp.float32),
    }
    hidden_states = jax.random.normal(keys[16], (B, S, HIDDEN), jnp.float32)
    # Additive BERT attention mask (B, 1, 1, S): last two tokens of batch 1 masked.
    keep = jnp.ones((B, S), jnp.float32).at[1, -2:].set(0.0)
    attention_mask = (1.0 - keep)[:, None, None, :] * -10000.0

    ref = _reference_layer(hidden_states, attention_mask, raw,
                           num_heads=NUM_HEADS, eps=EPS)

    # f32 weights: parity check against the pure-JAX reference.
    params = prepare_pet_bert_layer_params(raw)
    out = jax.block_until_ready(
        pet_bert_layer(hidden_states, attention_mask, params,
                       num_heads=NUM_HEADS, eps=EPS))
    assert out.shape == (B, S, HIDDEN)
    assert jnp.allclose(out, ref, atol=1e-3, rtol=1e-3), (
        f"f32 mismatch vs reference: {float(jnp.max(jnp.abs(out - ref)))}")

    # bf16 matmul operands + bf16 inter-kernel activations, f32 accumulation/epilogues.
    params_bf16 = prepare_pet_bert_layer_params(raw, matmul_dtype=jnp.bfloat16)
    out_bf16 = jax.block_until_ready(
        pet_bert_layer(hidden_states, attention_mask, params_bf16,
                       num_heads=NUM_HEADS, eps=EPS))
    assert float(jnp.max(jnp.abs(out_bf16 - ref))) < 0.1, "bf16 path diverged"

    print("KERNEL_OK")
</pallas_src>

<mosaic_0001>
module attributes {stable_mosaic.version = 11 : i64} {
  func.func @k(%arg0: i32, %arg1: memref<8x128xf32, #tpu.memory_space<vmem>>, %arg2: memref<8x128xf32, #tpu.memory_space<vmem>>, %arg3: memref<8x128xf32, #tpu.memory_space<vmem>>) attributes {dimension_semantics = [#tpu.dimension_semantics<arbitrary>], iteration_bounds = array<i64: 2>, scalar_prefetch = 0 : i64, scratch_operands = 0 : i64, tpu.core_type = #tpu.core_type<tc>, window_params = [{transform_indices = @transform_0, window_bounds = array<i64: 8, 128>}, {pipeline_mode = #tpu.pipeline_mode<synchronous>, transform_indices = @transform_1, window_bounds = array<i64: 8, 128>}, {transform_indices = @transform_2, window_bounds = array<i64: 8, 128>}]} {
    %c0 = arith.constant 0 : index
    %c0_0 = arith.constant 0 : index
    %0 = vector.load %arg1[%c0, %c0_0] : memref<8x128xf32, #tpu.memory_space<vmem>>, vector<8x128xf32>
    %c0_1 = arith.constant 0 : index
    %c0_2 = arith.constant 0 : index
    %1 = vector.load %arg2[%c0_1, %c0_2] : memref<8x128xf32, #tpu.memory_space<vmem>>, vector<8x128xf32>
    %2 = arith.addf %0, %1 : vector<8x128xf32>
    %c0_3 = arith.constant 0 : index
    %c0_4 = arith.constant 0 : index
    %3 = vector.load %arg3[%c0_3, %c0_4] : memref<8x128xf32, #tpu.memory_space<vmem>>, vector<8x128xf32>
    tpu.vector_store %arg3[%c0_3, %c0_4], %2 {strides = array<i32>} : memref<8x128xf32, #tpu.memory_space<vmem>>, vector<8x128xf32>,
    return
  }
  func.func @transform_0(%arg0: i32) -> (i32, i32) {
    %c0_i32 = arith.constant 0 : i32
    %c0_i32_0 = arith.constant 0 : i32
    return %arg0, %c0_i32 : i32, i32
  }
  func.func @transform_1(%arg0: i32) -> (i32, i32) {
    %c0_i32 = arith.constant 0 : i32
    %c0_i32_0 = arith.constant 0 : i32
    %c0_i32_1 = arith.constant 0 : i32
    return %c0_i32, %c0_i32_0 : i32, i32
  }
  func.func @transform_2(%arg0: i32) -> (i32, i32) {
    %c0_i32 = arith.constant 0 : i32
    %c0_i32_0 = arith.constant 0 : i32
    return %arg0, %c0_i32 : i32, i32
  }
}

module attributes {stable_mosaic.version = 11 : i64} {
  func.func @_linear_kernel(%arg0: i32, %arg1: memref<16x128xf32, #tpu.memory_space<vmem>>, %arg2: memref<128x384xf32, #tpu.memory_space<vmem>>, %arg3: memref<1x384xf32, #tpu.memory_space<vmem>>, %arg4: memref<16x384xf32, #tpu.memory_space<vmem>>) attributes {dimension_semantics = [#tpu.dimension_semantics<parallel>], iteration_bounds = array<i64: 1>, scalar_prefetch = 0 : i64, scratch_operands = 0 : i64, tpu.core_type = #tpu.core_type<tc>, window_params = [{transform_indices = @transform_0, window_bounds = array<i64: 16, 128>}, {pipeline_mode = #tpu.pipeline_mode<synchronous>, transform_indices = @transform_1, window_bounds = array<i64: 128, 384>}, {pipeline_mode = #tpu.pipeline_mode<synchronous>, transform_indices = @transform_2, window_bounds = array<i64: 1, 384>}, {transform_indices = @transform_3, window_bounds = array<i64: 16, 384>}]} {
    %c0 = arith.constant 0 : index
    %c0_0 = arith.constant 0 : index
    %0 = vector.load %arg1[%c0, %c0_0] : memref<16x128xf32, #tpu.memory_space<vmem>>, vector<16x128xf32>
    %c0_1 = arith.constant 0 : index
    %c0_2 = arith.constant 0 : index
    %1 = vector.load %arg2[%c0_1, %c0_2] : memref<128x384xf32, #tpu.memory_space<vmem>>, vector<128x384xf32>
    %cst = arith.constant dense<0.000000e+00> : vector<16x384xf32>
    %2 = tpu.matmul %0, %1, %cst {dimension_numbers = #tpu.dot_dimension_numbers<[1], [0], [0], [1], [0, 0, 1, 1], [], []>} : vector<16x128xf32>, vector<128x384xf32>, vector<16x384xf32> -> vector<16x384xf32>
    %c0_3 = arith.constant 0 : index
    %c0_4 = arith.constant 0 : index
    %3 = vector.load %arg3[%c0_3, %c0_4] : memref<1x384xf32, #tpu.memory_space<vmem>>, vector<1x384xf32>
    %4 = vector.broadcast %3 : vector<1x384xf32> to vector<16x384xf32>
    %5 = arith.addf %2, %4 : vector<16x384xf32>
    %c0_5 = arith.constant 0 : index
    %c0_6 = arith.constant 0 : index
    %6 = vector.load %arg4[%c0_5, %c0_6] : memref<16x384xf32, #tpu.memory_space<vmem>>, vector<16x384xf32>
    tpu.vector_store %arg4[%c0_5, %c0_6], %5 {strides = array<i32>} : memref<16x384xf32, #tpu.memory_space<vmem>>, vector<16x384xf32>,
    return
  }
  func.func @transform_0(%arg0: i32) -> (i32, i32) {
    %c0_i32 = arith.constant 0 : i32
    %c0_i32_0 = arith.constant 0 : i32
    return %arg0, %c0_i32 : i32, i32
  }
  func.func @transform_1(%arg0: i32) -> (i32, i32) {
    %c0_i32 = arith.constant 0 : i32
    %c0_i32_0 = arith.constant 0 : i32
    %c0_i32_1 = arith.constant 0 : i32
    return %c0_i32, %c0_i32_0 : i32, i32
  }
  func.func @transform_2(%arg0: i32) -> (i32, i32) {
    %c0_i32 = arith.constant 0 : i32
    %c0_i32_0 = arith.constant 0 : i32
    %c0_i32_1 = arith.constant 0 : i32
    return %c0_i32, %c0_i32_0 : i32, i32
  }
  func.func @transform_3(%arg0: i32) -> (i32, i32) {
    %c0_i32 = arith.constant 0 : i32
    %c0_i32_0 = arith.constant 0 : i32
    return %arg0, %c0_i32 : i32, i32
  }
}

</mosaic_0001>

<llo_original>
// kernel: tpu_custom_call.1
$region0: #{tpu_custom_call.1}
  #allocation0 [shape = 'u32[]', space=smem, size = 0x4, offset = 0x4, fixed_abs, tag = 'smem constant byte address 0x4 - core index']
  #allocation1 [shape = 'u32[144,128]{1,0:T(1,128)}', space=vmem, size = 0x12000, scoped, tag = 'internal scratch']
  %s0 = inlined_call_operand.hbm [shape: f32[16,128], index: 0, kind: input, shape index: {}]
  %s1 = inlined_call_operand.hbm [shape: f32[8,128], index: 1, kind: input, shape index: {}]
  %s2 = inlined_call_operand.hbm [shape: f32[16,128], index: 2, kind: output, shape index: {}]
  %s3 = sld [smem:[#allocation0]]
  $region49: #{tpu_custom_call.1} parent=0
    _
  %s5 = ssub.s32 1, %s3
  %s6 = scalar_select 0, %s5, %s3
  $region1: #{tpu_custom_call.1} parent=0
    #allocation2 [shape = 'u8[8192]{0}', space=vmem, size = 0x2000, scoped, tag = 'input window, operand 0']
    #allocation3 [shape = 's32[2]{0}', space=sflag, size = 0x8, scoped, tag = 'scoped memory for tpu_custom_call.1']
    #allocation4 [shape = 's32[2]{0}', space=sflag, size = 0x8, scoped, tag = 'scoped memory for tpu_custom_call.1']
    #allocation5 [shape = 'u8[4096]{0}', space=vmem, size = 0x1000, scoped, tag = 'input window, operand 1, single buffered']
    #allocation6 [shape = 's32[1]{0}', space=sflag, size = 0x4, scoped, tag = 'scoped memory for tpu_custom_call.1']
    #allocation7 [shape = 'u8[8192]{0}', space=vmem, size = 0x2000, scoped, tag = 'output window, operand 0']
    %7 = vsyncpa [#allocation3], 0
    %s8 = scalar_lea.sflag [#allocation3], 1
    %9 = vsyncpa %s8, 0
    %10 = vsyncpa [#allocation6], 0
    %11 = vsyncpa [#allocation4], 0
    %s12 = scalar_lea.sflag [#allocation4], 1
    %13 = vsyncpa %s12, 0
    loop: start=0, step=1, limit=4
    $region2: #{tpu_custom_call.1} parent=1 // loop_pre_header
      _
    $region3: #{tpu_custom_call.1} parent=1 // loop_header
      %s15 = sphi 0, %s19
      %p16 = scmp.ge.s32.totalorder %s15, 4
      %s25 = sphi 0, %s27
      %s28 = sphi 0, %s25
      %s29 = sphi 0, %s28
      %s45 = sphi 0, %s29
      %s49 = sphi 0, %s49
      %s51 = sphi 0, %s49
      %s52 = sphi 0, %s51
      %s66 = sphi 0, %s52
      %s72 = sphi 0, %s74
      %s75 = sphi 0, %s72
      %s76 = sphi 0, %s75
      %s92 = sphi 0, %s76
    $region4: #{tpu_custom_call.1} parent=1 // loop_header_branch
      %18 = sbr.rel (%p16) target = $region8
    $region5: #{tpu_custom_call.1} parent=1 // loop_body
      %s20 = ssub.s32 %s15, 1
      %s21 = ssub.s32 %s15, 2
      %s22 = sadd.s32 %s15, 1
      %s23 = ssub.s32 %s15, %s22
      %p24 = scmp.eq.s32.totalorder %s23, 0
      %s26 = sadd.s32 %s25, 1
      %s27 = scalar_select %p24, %s25, %s26
      %p30 = pneg %p24
      %p31 = scmp.eq.s32.totalorder %s15, 1
      %p32 = por %p30, %p31
      %p33 = scmp.ne.s32.totalorder %s25, %s28
      %p34 = scmp.eq.s32.totalorder %s15, 0
      %p35 = por %p33, %p34
      %p36 = scmp.ne.s32.totalorder %s25, %s28
      %p37 = scmp.eq.s32.totalorder %s20, 1
      %p38 = por %p36, %p37
      %p39 = scmp.ne.s32.totalorder %s28, %s29
      %p40 = scmp.eq.s32.totalorder %s20, 0
      %p41 = por %p39, %p40
      %p42 = scmp.ne.s32.totalorder %s28, %s29
      %p43 = scmp.eq.s32.totalorder %s21, 1
      %p44 = por %p42, %p43
      %p46 = scmp.ne.s32.totalorder %s29, %s45
      %p47 = scmp.eq.s32.totalorder %s21, 0
      %p48 = por %p46, %p47
      %s50 = sadd.s32 %s49, 1
      %p53 = scmp.eq.s32.totalorder %s15, 1
      %p54 = scmp.ne.s32.totalorder %s49, %s51
      %p55 = scmp.eq.s32.totalorder %s15, 0
      %p56 = por %p54, %p55
      %p57 = scmp.ne.s32.totalorder %s49, %s51
      %p58 = scmp.eq.s32.totalorder %s20, 1
      %p59 = por %p57, %p58
      %p60 = scmp.ne.s32.totalorder %s51, %s52
      %p61 = scmp.eq.s32.totalorder %s20, 0
      %p62 = por %p60, %p61
      %p63 = scmp.ne.s32.totalorder %s51, %s52
      %p64 = scmp.eq.s32.totalorder %s21, 1
      %p65 = por %p63, %p64
      %p67 = scmp.ne.s32.totalorder %s52, %s66
      %p68 = scmp.eq.s32.totalorder %s21, 0
      %p69 = por %p67, %p68
      %s70 = ssub.s32 %s15, %s22
      %p71 = scmp.eq.s32.totalorder %s70, 0
      %s73 = sadd.s32 %s72, 1
      %s74 = scalar_select %p71, %s72, %s73
      %p77 = pneg %p71
      %p78 = scmp.eq.s32.totalorder %s15, 1
      %p79 = por %p77, %p78
      %p80 = scmp.ne.s32.totalorder %s72, %s75
      %p81 = scmp.eq.s32.totalorder %s15, 0
      %p82 = por %p80, %p81
      %p83 = scmp.ne.s32.totalorder %s72, %s75
      %p84 = scmp.eq.s32.totalorder %s20, 1
      %p85 = por %p83, %p84
      %p86 = scmp.ne.s32.totalorder %s75, %s76
      %p87 = scmp.eq.s32.totalorder %s20, 0
      %p88 = por %p86, %p87
      %p89 = scmp.ne.s32.totalorder %s75, %s76
      %p90 = scmp.eq.s32.totalorder %s21, 1
      %p91 = por %p89, %p90
      %p93 = scmp.ne.s32.totalorder %s76, %s92
      %p94 = scmp.eq.s32.totalorder %s21, 0
      %p95 = por %p93, %p94
      %p96 = scmp.le.s32.totalorder 1, %s15
      %p97 = scmp.lt.s32.totalorder %s15, 3
      %p98 = pnand %p96, %p97
      %p99 = pneg %p98
      // Predicated region
      $region9: #{tpu_custom_call.1} parent=5 // pred_check
        _
      $region10: #{tpu_custom_call.1} parent=5 // pred_check_branch
        %101 = sbr.rel (%p98) target = $region12
      $region11: #{tpu_custom_call.1} parent=5 // pred_region
        %s102 = ssub.s32 %s15, 1
        // Predicated region
        $region13: #{tpu_custom_call.1} parent=11 // pred_check
          %p103 = pneg %p62
        $region14: #{tpu_custom_call.1} parent=11 // pred_check_branch
          %105 = sbr.rel (%p103) target = $region16
        $region15: #{tpu_custom_call.1} parent=11 // pred_region
          %s107 = ssub.s32 128, 128
          %108 = vsyncadd [#allocation6], %s107
          %s110 = sshll.u32 [#allocation5], 4
          %s111 = int_to_ptr.vmem [resolvable:$true] %s110
          %113 = dma.hbm_to_vmem [thread:$0]  %s1, 128, %s111, [#allocation6]
        $region16: #{tpu_custom_call.1} parent=11 // pred_fallthru
          _
      $region12: #{tpu_custom_call.1} parent=5 // pred_fallthru
        _
      %p114 = scmp.lt.s32.totalorder %s15, 2
      // Predicated region
      $region17: #{tpu_custom_call.1} parent=5 // pred_check
        %p115 = pneg %p114
      $region18: #{tpu_custom_call.1} parent=5 // pred_check_branch
        %117 = sbr.rel (%p115) target = $region20
      $region19: #{tpu_custom_call.1} parent=5 // pred_region
        // Predicated region
        $region21: #{tpu_custom_call.1} parent=19 // pred_check
          %p118 = pneg %p35
        $region22: #{tpu_custom_call.1} parent=19 // pred_check_branch
          %120 = sbr.rel (%p118) target = $region24
        $region23: #{tpu_custom_call.1} parent=19 // pred_region
          %s121 = sand.u32 %s25, 1
          %s122 = scalar_lea.sflag [#allocation3], %s121
          %s123 = sand.u32 %s25, 1
          %s124 = smul.addr %s123, 8
          %s125 = scalar_lea.vmem [#allocation2], %s124
          %s127 = ssub.s32 128, 128
          %128 = vsyncadd %s122, %s127
          %s129 = smul.addr %s15, 128
          %s130 = scalar_lea.hbm %s0, %s129
          %s132 = sshll.u32 %s125, 4
          %s133 = int_to_ptr.vmem [resolvable:$true] %s132
          %135 = dma.hbm_to_vmem [thread:$0]  %s130, 128, %s133, %s122
        $region24: #{tpu_custom_call.1} parent=19 // pred_fallthru
          _
      $region20: #{tpu_custom_call.1} parent=5 // pred_fallthru
        _
      %p136 = scmp.le.s32.totalorder 1, %s15
      %p137 = scmp.lt.s32.totalorder %s15, 3
      %p138 = pnand %p136, %p137
      %p139 = pneg %p138
      // Predicated region
      $region25: #{tpu_custom_call.1} parent=5 // pred_check
        _
      $region26: #{tpu_custom_call.1} parent=5 // pred_check_branch
        %141 = sbr.rel (%p138) target = $region28
      $region27: #{tpu_custom_call.1} parent=5 // pred_region
        %s142 = ssub.s32 %s15, 1
        %s143 = sand.u32 %s28, 1
        %s144 = scalar_lea.sflag [#allocation3], %s143
        %s145 = sand.u32 %s28, 1
        %s146 = smul.addr %s145, 8
        %s147 = scalar_lea.vmem [#allocation2], %s146
        // Predicated region
        $region29: #{tpu_custom_call.1} parent=27 // pred_check
          %p148 = pneg %p41
        $region30: #{tpu_custom_call.1} parent=27 // pred_check_branch
          %150 = sbr.rel (%p148) target = $region32
        $region31: #{tpu_custom_call.1} parent=27 // pred_region
          %151 = dma.done %s144, 128
        $region32: #{tpu_custom_call.1} parent=27 // pred_fallthru
          _
        // Predicated region
        $region33: #{tpu_custom_call.1} parent=27 // pred_check
          %p152 = pneg %p62
        $region34: #{tpu_custom_call.1} parent=27 // pred_check_branch
          %154 = sbr.rel (%p152) target = $region36
        $region35: #{tpu_custom_call.1} parent=27 // pred_region
          %155 = dma.done [#allocation6], 128
        $region36: #{tpu_custom_call.1} parent=27 // pred_fallthru
          _
        %s156 = sand.u32 %s28, 1
        %s157 = scalar_lea.sflag [#allocation3], %s156
        %s158 = sand.u32 %s28, 1
        %s159 = smul.addr %s158, 8
        %s160 = scalar_lea.vmem [#allocation2], %s159
        %p161 = pneg %p41
        %p162 = pneg %p38
        %p163 = pneg %p62
        %p164 = pneg %p59
        %p165 = pneg %p88
        %p166 = pneg %p85
        %s167 = sand.u32 %s75, 1
        %s168 = scalar_lea.sflag [#allocation4], %s167
        %s169 = sand.u32 %s75, 1
        %s170 = smul.addr %s169, 8
        %s171 = scalar_lea.vmem [#allocation7], %s170
        %v172 = vld [vmem:[%s147] sm:$0xff]
        %v173 = vld [vmem:[#allocation5] sm:$0xff]
        %v174 = vadd.f32 %v172, %v173
        %175 = vst [vmem:[%s171] sm:$0xff] %v174
        %s176 = sand.u32 %s75, 1
        %s177 = scalar_lea.sflag [#allocation4], %s176
        %s178 = sand.u32 %s75, 1
        %s179 = smul.addr %s178, 8
        %s180 = scalar_lea.vmem [#allocation7], %s179
        // Predicated region
        $region37: #{tpu_custom_call.1} parent=27 // pred_check
          %p181 = pneg %p85
        $region38: #{tpu_custom_call.1} parent=27 // pred_check_branch
          %183 = sbr.rel (%p181) target = $region40
        $region39: #{tpu_custom_call.1} parent=27 // pred_region
          %s185 = ssub.s32 128, 128
          %186 = vsyncadd %s177, %s185
          %s187 = smul.addr %s20, 128
          %s188 = scalar_lea.hbm %s2, %s187
          %s190 = sshll.u32 %s180, 4
          %s191 = int_to_ptr.vmem [resolvable:$true] %s190
          %193 = dma.vmem_to_hbm [thread:$0]  %s191, 128, %s188, %s177
        $region40: #{tpu_custom_call.1} parent=27 // pred_fallthru
          _
      $region28: #{tpu_custom_call.1} parent=5 // pred_fallthru
        _
      %p194 = scmp.le.s32.totalorder 2, %s15
      // Predicated region
      $region41: #{tpu_custom_call.1} parent=5 // pred_check
        %p195 = pneg %p194
      $region42: #{tpu_custom_call.1} parent=5 // pred_check_branch
        %197 = sbr.rel (%p195) target = $region44
      $region43: #{tpu_custom_call.1} parent=5 // pred_region
        %s198 = ssub.s32 %s15, 2
        // Predicated region
        $region45: #{tpu_custom_call.1} parent=43 // pred_check
          %p199 = pneg %p91
        $region46: #{tpu_custom_call.1} parent=43 // pred_check_branch
          %201 = sbr.rel (%p199) target = $region48
        $region47: #{tpu_custom_call.1} parent=43 // pred_region
          %s202 = sand.u32 %s76, 1
          %s203 = scalar_lea.sflag [#allocation4], %s202
          %s204 = sand.u32 %s76, 1
          %s205 = smul.addr %s204, 8
          %s206 = scalar_lea.vmem [#allocation7], %s205
          %207 = dma.done %s203, 128
        $region48: #{tpu_custom_call.1} parent=43 // pred_fallthru
          _
      $region44: #{tpu_custom_call.1} parent=5 // pred_fallthru
        _
    $region6: #{tpu_custom_call.1} parent=1 // loop_footer
      %s19 = sadd.s32 1, %s15
    $region7: #{tpu_custom_call.1} parent=1 // loop_footer_branch
      %14 = sbr.rel target = $region3
    $region8: #{tpu_custom_call.1} parent=1 // loop_exit
      _
    %208 = vsyncpa [#allocation3], 1
    %s209 = scalar_lea.sflag [#allocation3], 1
    %210 = vsyncpa %s209, 1
    %211 = vsyncpa [#allocation6], 1
    %212 = vsyncpa [#allocation4], 1
    %s213 = scalar_lea.sflag [#allocation4], 1
    %214 = vsyncpa %s213, 1

// kernel: tpu_custom_call.1
$region0: #{tpu_custom_call.1}
  #allocation0 [shape = 'u32[]', space=smem, size = 0x4, offset = 0x4, fixed_abs, tag = 'smem constant byte address 0x4 - core index']
  #allocation1 [shape = 'u32[144,128]{1,0:T(1,128)}', space=vmem, size = 0x12000, scoped, tag = 'internal scratch']
  %s0 = inlined_call_operand.hbm [shape: f32[16,128], index: 0, kind: input, shape index: {}]
  %s1 = inlined_call_operand.hbm [shape: f32[128,384], index: 1, kind: input, shape index: {}]
  %s2 = inlined_call_operand.vmem [shape: f32[1,384], index: 2, kind: input, shape index: {}]
  %s3 = inlined_call_operand.hbm [shape: f32[16,384], index: 3, kind: output, shape index: {}]
  %s4 = sld [smem:[#allocation0]]
  $region30: #{tpu_custom_call.1} parent=0
    _
  %s6 = ssub.s32 1, %s4
  %s7 = scalar_select 0, %s6, %s4
  $region1: #{tpu_custom_call.1} parent=0
    #allocation2 [shape = 'u8[8192]{0}', space=vmem, size = 0x2000, scoped, tag = 'input window, operand 0, single buffered']
    #allocation3 [shape = 's32[1]{0}', space=sflag, size = 0x4, scoped, tag = 'scoped memory for tpu_custom_call.1']
    #allocation4 [shape = 's32[1]{0}', space=sflag, size = 0x4, scoped, tag = 'scoped memory for tpu_custom_call.1']
    #allocation5 [shape = 'u8[196608]{0}', space=vmem, size = 0x30000, scoped, tag = 'input window, operand 1, single buffered']
    #allocation6 [shape = 's32[1]{0}', space=sflag, size = 0x4, scoped, tag = 'scoped memory for tpu_custom_call.1']
    #allocation7 [shape = 'u8[24576]{0}', space=vmem, size = 0x6000, scoped, tag = 'output window, operand 0, single buffered']
    %8 = vsyncpa [#allocation3], 0
    %9 = vsyncpa [#allocation6], 0
    %10 = vsyncpa [#allocation4], 0
    // Predicated region
    $region2: #{tpu_custom_call.1} parent=1 // pred_check
      _
    $region3: #{tpu_custom_call.1} parent=1 // pred_check_branch
      %12 = sbr.rel (0) target = $region5
    $region4: #{tpu_custom_call.1} parent=1 // pred_region
      %s14 = ssub.s32 256, 256
      %15 = vsyncadd [#allocation3], %s14
      %s16 = sshll.u32 [#allocation2], 4
      %s17 = int_to_ptr.vmem [resolvable:$true] %s16
      %22 = dma.hbm_to_vmem [thread:$0]  %s0, 256, %s17, [#allocation3], 128, 128, 8
    $region5: #{tpu_custom_call.1} parent=1 // pred_fallthru
      _
    // Predicated region
    $region6: #{tpu_custom_call.1} parent=1 // pred_check
      _
    $region7: #{tpu_custom_call.1} parent=1 // pred_check_branch
      %24 = sbr.rel (0) target = $region9
    $region8: #{tpu_custom_call.1} parent=1 // pred_region
      %s26 = ssub.s32 6144, 6144
      %27 = vsyncadd [#allocation6], %s26
      %s28 = sshll.u32 [#allocation5], 4
      %s29 = int_to_ptr.vmem [resolvable:$true] %s28
      %34 = dma.hbm_to_vmem [thread:$0]  %s1, 6144, %s29, [#allocation6], 384, 384, 24
    $region9: #{tpu_custom_call.1} parent=1 // pred_fallthru
      _
    // Predicated region
    $region10: #{tpu_custom_call.1} parent=1 // pred_check
      _
    $region11: #{tpu_custom_call.1} parent=1 // pred_check_branch
      %36 = sbr.rel (0) target = $region13
    $region12: #{tpu_custom_call.1} parent=1 // pred_region
      _
    $region13: #{tpu_custom_call.1} parent=1 // pred_fallthru
      _
    // Predicated region
    $region14: #{tpu_custom_call.1} parent=1 // pred_check
      _
    $region15: #{tpu_custom_call.1} parent=1 // pred_check_branch
      %38 = sbr.rel (0) target = $region17
    $region16: #{tpu_custom_call.1} parent=1 // pred_region
      %39 = dma.done [#allocation3], 256
    $region17: #{tpu_custom_call.1} parent=1 // pred_fallthru
      _
    // Predicated region
    $region18: #{tpu_custom_call.1} parent=1 // pred_check
      _
    $region19: #{tpu_custom_call.1} parent=1 // pred_check_branch
      %41 = sbr.rel (0) target = $region21
    $region20: #{tpu_custom_call.1} parent=1 // pred_region
      %42 = dma.done [#allocation6], 6144
    $region21: #{tpu_custom_call.1} parent=1 // pred_fallthru
      _
    %v43 = vld [vmem:[#allocation2] sm:$0xff]
    %v44 = vld [vmem:[#allocation2 + $0x8] sm:$0xff]
    %v45 = vld [vmem:[#allocation5] sm:$0xff]
    %v46 = vld [vmem:[#allocation5 + $0x8] sm:$0xff]
    %v47 = vld [vmem:[#allocation5 + $0x10] sm:$0xff]
    %v48 = vld [vmem:[#allocation5 + $0x18] sm:$0xff]
    %v49 = vld [vmem:[#allocation5 + $0x20] sm:$0xff]
    %v50 = vld [vmem:[#allocation5 + $0x28] sm:$0xff]
    %v51 = vld [vmem:[#allocation5 + $0x30] sm:$0xff]
    %v52 = vld [vmem:[#allocation5 + $0x38] sm:$0xff]
    %v53 = vld [vmem:[#allocation5 + $0x40] sm:$0xff]
    %v54 = vld [vmem:[#allocation5 + $0x48] sm:$0xff]
    %v55 = vld [vmem:[#allocation5 + $0x50] sm:$0xff]
    %v56 = vld [vmem:[#allocation5 + $0x58] sm:$0xff]
    %v57 = vld [vmem:[#allocation5 + $0x60] sm:$0xff]
    %v58 = vld [vmem:[#allocation5 + $0x68] sm:$0xff]
    %v59 = vld [vmem:[#allocation5 + $0x70] sm:$0xff]
    %v60 = vld [vmem:[#allocation5 + $0x78] sm:$0xff]
    %v61 = vld [vmem:[#allocation5 + $0x80] sm:$0xff]
    %v62 = vld [vmem:[#allocation5 + $0x88] sm:$0xff]
    %v63 = vld [vmem:[#allocation5 + $0x90] sm:$0xff]
    %v64 = vld [vmem:[#allocation5 + $0x98] sm:$0xff]
    %v65 = vld [vmem:[#allocation5 + $0xa0] sm:$0xff]
    %v66 = vld [vmem:[#allocation5 + $0xa8] sm:$0xff]
    %v67 = vld [vmem:[#allocation5 + $0xb0] sm:$0xff]
    %v68 = vld [vmem:[#allocation5 + $0xb8] sm:$0xff]
    %v69 = vld [vmem:[#allocation5 + $0xc0] sm:$0xff]
    %v70 = vld [vmem:[#allocation5 + $0xc8] sm:$0xff]
    %v71 = vld [vmem:[#allocation5 + $0xd0] sm:$0xff]
    %v72 = vld [vmem:[#allocation5 + $0xd8] sm:$0xff]
    %v73 = vld [vmem:[#allocation5 + $0xe0] sm:$0xff]
    %v74 = vld [vmem:[#allocation5 + $0xe8] sm:$0xff]
    %v75 = vld [vmem:[#allocation5 + $0xf0] sm:$0xff]
    %v76 = vld [vmem:[#allocation5 + $0xf8] sm:$0xff]
    %v77 = vld [vmem:[#allocation5 + $0x100] sm:$0xff]
    %v78 = vld [vmem:[#allocation5 + $0x108] sm:$0xff]
    %v79 = vld [vmem:[#allocation5 + $0x110] sm:$0xff]
    %v80 = vld [vmem:[#allocation5 + $0x118] sm:$0xff]
    %v81 = vld [vmem:[#allocation5 + $0x120] sm:$0xff]
    %v82 = vld [vmem:[#allocation5 + $0x128] sm:$0xff]
    %v83 = vld [vmem:[#allocation5 + $0x130] sm:$0xff]
    %v84 = vld [vmem:[#allocation5 + $0x138] sm:$0xff]
    %v85 = vld [vmem:[#allocation5 + $0x140] sm:$0xff]
    %v86 = vld [vmem:[#allocation5 + $0x148] sm:$0xff]
    %v87 = vld [vmem:[#allocation5 + $0x150] sm:$0xff]
    %v88 = vld [vmem:[#allocation5 + $0x158] sm:$0xff]
    %v89 = vld [vmem:[#allocation5 + $0x160] sm:$0xff]
    %v90 = vld [vmem:[#allocation5 + $0x168] sm:$0xff]
    %v91 = vld [vmem:[#allocation5 + $0x170] sm:$0xff]
    %v92 = vld [vmem:[#allocation5 + $0x178] sm:$0xff]
    %v93 = vld [vmem:[%s2] sm:$0x7]
    %v95 = vlaneseq
    %v96 = vshrl.u32 %v95, 7
    %v97 = vsub.s32 0, %v96
    %v98 = vrot.slane %v93, %v97
    %v99 = vlaneseq
    %v100 = vshrl.u32 %v99, 7
    %v101 = vsub.s32 1, %v100
    %v102 = vrot.slane %v93, %v101
    %v103 = vlaneseq
    %v104 = vshrl.u32 %v103, 7
    %v105 = vsub.s32 2, %v104
    %v106 = vrot.slane %v93, %v105
    %110 = vmatprep.subr.mxu0 %v91
    %111 = vmatpush1.msra.mxu0 %v90
    %112 = vmatprep.subr.mxu0 %v88
    %113 = vmatpush1.msra.mxu0 %v87
    %114 = vmatprep.subr.mxu0 %v85
    %115 = vmatpush1.msra.mxu0 %v84
    %116 = vmatprep.subr.mxu0 %v82
    %117 = vmatpush1.msra.mxu0 %v81
    %118 = vmatprep.subr.mxu0 %v79
    %119 = vmatpush1.msra.mxu0 %v78
    %120 = vmatprep.subr.mxu0 %v76
    %121 = vmatpush1.msra.mxu0 %v75
    %122 = vmatprep.subr.mxu0 %v73
    %123 = vmatpush1.msra.mxu0 %v72
    %124 = vmatprep.subr.mxu0 %v70
    %125 = vmatpush1.msra.mxu0 %v69
    %126 = vmatprep.subr.mxu0 %v67
    %127 = vmatpush1.msra.mxu0 %v66
    %128 = vmatprep.subr.mxu0 %v64
    %129 = vmatpush1.msra.mxu0 %v63
    %130 = vmatprep.subr.mxu0 %v61
    %131 = vmatpush1.msra.mxu0 %v60
    %132 = vmatprep.subr.mxu0 %v58
    %133 = vmatpush1.msra.mxu0 %v57
    %134 = vmatprep.subr.mxu0 %v55
    %135 = vmatpush1.msra.mxu0 %v54
    %136 = vmatprep.subr.mxu0 %v52
    %137 = vmatpush1.msra.mxu0 %v51
    %138 = vmatprep.subr.mxu0 %v49
    %139 = vmatpush1.msra.mxu0 %v48
    %140 = vmatprep.subr.mxu0 %v46
    %141 = vmatpush1.msra.mxu0 %v45
    %142 = vmatprep.subr.mxu0 0.0
    %143 = vmatpush2.msra.mxu0 0.0
    %144 = vmatprep.subr.mxu0 0.0
    %145 = vmatpush2.msra.mxu0 0.0
    %146 = vmatprep.subr.mxu0 0.0
    %147 = vmatpush2.msra.mxu0 0.0
    %148 = vmatprep.subr.mxu0 0.0
    %149 = vmatpush2.msra.mxu0 0.0
    %150 = vmatprep.subr.mxu0 0.0
    %151 = vmatpush2.msra.mxu0 0.0
    %152 = vmatprep.subr.mxu0 0.0
    %153 = vmatpush2.msra.mxu0 0.0
    %154 = vmatprep.subr.mxu0 0.0
    %155 = vmatpush2.msra.mxu0 0.0
    %156 = vmatprep.subr.mxu0 0.0
    %157 = vmatpush2.msra.mxu0 0.0
    %158 = vmatprep.subr.mxu0 0.0
    %159 = vmatpush2.msra.mxu0 0.0
    %160 = vmatprep.subr.mxu0 0.0
    %161 = vmatpush2.msra.mxu0 0.0
    %162 = vmatprep.subr.mxu0 0.0
    %163 = vmatpush2.msra.mxu0 0.0
    %164 = vmatprep.subr.mxu0 0.0
    %165 = vmatpush2.msra.mxu0 0.0
    %166 = vmatprep.subr.mxu0 0.0
    %167 = vmatpush2.msra.mxu0 0.0
    %168 = vmatprep.subr.mxu0 0.0
    %169 = vmatpush2.msra.mxu0 0.0
    %170 = vmatprep.subr.mxu0 0.0
    %171 = vmatpush2.msra.mxu0 0.0
    %172 = vmatprep.subr.mxu0 0.0
    %173 = vmatpush2.msra.mxu0 0.0
    %174 = vmatprep.mubr.f32.mxu0 0.0
    %175 = vmatmul.mubr.f32.gmra.mxu0 %v43
    %v176 = vpop.f32.mrf.mxu0
    %v177 = vadd.f32 %v98, %v176
    %v178 = vpop.f32.mrf.mxu0
    %v179 = vadd.f32 %v102, %v178
    %180 = vmatprep.mubr.f32.mxu0 0.0
    %181 = vmatmul.mubr.f32.gmra.mxu0 %v44
    %v182 = vpop.f32.mrf.mxu0
    %v183 = vadd.f32 %v98, %v182
    %v184 = vpop.f32.mrf.mxu0
    %v185 = vadd.f32 %v102, %v184
    %186 = vdwg.mxu0
    %187 = vmatprep.subr.mxu0 0.0
    %188 = vmatpush1.msra.mxu0 %v92
    %189 = vmatprep.subr.mxu0 0.0
    %190 = vmatpush1.msra.mxu0 %v89
    %191 = vmatprep.subr.mxu0 0.0
    %192 = vmatpush1.msra.mxu0 %v86
    %193 = vmatprep.subr.mxu0 0.0
    %194 = vmatpush1.msra.mxu0 %v83
    %195 = vmatprep.subr.mxu0 0.0
    %196 = vmatpush1.msra.mxu0 %v80
    %197 = vmatprep.subr.mxu0 0.0
    %198 = vmatpush1.msra.mxu0 %v77
    %199 = vmatprep.subr.mxu0 0.0
    %200 = vmatpush1.msra.mxu0 %v74
    %201 = vmatprep.subr.mxu0 0.0
    %202 = vmatpush1.msra.mxu0 %v71
    %203 = vmatprep.subr.mxu0 0.0
    %204 = vmatpush1.msra.mxu0 %v68
    %205 = vmatprep.subr.mxu0 0.0
    %206 = vmatpush1.msra.mxu0 %v65
    %207 = vmatprep.subr.mxu0 0.0
    %208 = vmatpush1.msra.mxu0 %v62
    %209 = vmatprep.subr.mxu0 0.0
    %210 = vmatpush1.msra.mxu0 %v59
    %211 = vmatprep.subr.mxu0 0.0
    %212 = vmatpush1.msra.mxu0 %v56
    %213 = vmatprep.subr.mxu0 0.0
    %214 = vmatpush1.msra.mxu0 %v53
    %215 = vmatprep.subr.mxu0 0.0
    %216 = vmatpush1.msra.mxu0 %v50
    %217 = vmatprep.subr.mxu0 0.0
    %218 = vmatpush1.msra.mxu0 %v47
    %219 = vmatprep.subr.mxu0 0.0
    %220 = vmatpush2.msra.mxu0 0.0
    %221 = vmatprep.subr.mxu0 0.0
    %222 = vmatpush2.msra.mxu0 0.0
    %223 = vmatprep.subr.mxu0 0.0
    %224 = vmatpush2.msra.mxu0 0.0
    %225 = vmatprep.subr.mxu0 0.0
    %226 = vmatpush2.msra.mxu0 0.0
    %227 = vmatprep.subr.mxu0 0.0
    %228 = vmatpush2.msra.mxu0 0.0
    %229 = vmatprep.subr.mxu0 0.0
    %230 = vmatpush2.msra.mxu0 0.0
    %231 = vmatprep.subr.mxu0 0.0
    %232 = vmatpush2.msra.mxu0 0.0
    %233 = vmatprep.subr.mxu0 0.0
    %234 = vmatpush2.msra.mxu0 0.0
    %235 = vmatprep.subr.mxu0 0.0
    %236 = vmatpush2.msra.mxu0 0.0
    %237 = vmatprep.subr.mxu0 0.0
    %238 = vmatpush2.msra.mxu0 0.0
    %239 = vmatprep.subr.mxu0 0.0
    %240 = vmatpush2.msra.mxu0 0.0
    %241 = vmatprep.subr.mxu0 0.0
    %242 = vmatpush2.msra.mxu0 0.0
    %243 = vmatprep.subr.mxu0 0.0
    %244 = vmatpush2.msra.mxu0 0.0
    %245 = vmatprep.subr.mxu0 0.0
    %246 = vmatpush2.msra.mxu0 0.0
    %247 = vmatprep.subr.mxu0 0.0
    %248 = vmatpush2.msra.mxu0 0.0
    %249 = vmatprep.subr.mxu0 0.0
    %250 = vmatpush2.msra.mxu0 0.0
    %251 = vmatprep.mubr.f32.mxu0 0.0
    %252 = vmatmul.mubr.f32.gmra.mxu0 %v43
    %v253 = vpop.f32.mrf.mxu0
    %v254 = vadd.f32 %v106, %v253
    %v255 = vpop.f32.mrf.mxu0
    %256 = vmatprep.mubr.f32.mxu0 0.0
    %257 = vmatmul.mubr.f32.gmra.mxu0 %v44
    %v258 = vpop.f32.mrf.mxu0
    %v259 = vadd.f32 %v106, %v258
    %v260 = vpop.f32.mrf.mxu0
    %261 = vdwg.mxu0
    %262 = vst [vmem:[#allocation7] sm:$0xff] %v177
    %263 = vst [vmem:[#allocation7 + $0x8] sm:$0xff] %v179
    %264 = vst [vmem:[#allocation7 + $0x10] sm:$0xff] %v254
    %265 = vst [vmem:[#allocation7 + $0x18] sm:$0xff] %v183
    %266 = vst [vmem:[#allocation7 + $0x20] sm:$0xff] %v185
    %267 = vst [vmem:[#allocation7 + $0x28] sm:$0xff] %v259
    // Predicated region
    $region22: #{tpu_custom_call.1} parent=1 // pred_check
      _
    $region23: #{tpu_custom_call.1} parent=1 // pred_check_branch
      %269 = sbr.rel (0) target = $region25
    $region24: #{tpu_custom_call.1} parent=1 // pred_region
      %s271 = ssub.s32 768, 768
      %272 = vsyncadd [#allocation4], %s271
      %s273 = sshll.u32 [#allocation7], 4
      %s274 = int_to_ptr.vmem [resolvable:$true] %s273
      %279 = dma.vmem_to_hbm [thread:$0]  %s274, 768, %s3, [#allocation4], 384, 384, 24
    $region25: #{tpu_custom_call.1} parent=1 // pred_fallthru
      _
    // Predicated region
    $region26: #{tpu_custom_call.1} parent=1 // pred_check
      _
    $region27: #{tpu_custom_call.1} parent=1 // pred_check_branch
      %281 = sbr.rel (0) target = $region29
    $region28: #{tpu_custom_call.1} parent=1 // pred_region
      %282 = dma.done [#allocation4], 768
    $region29: #{tpu_custom_call.1} parent=1 // pred_fallthru
      _
    %283 = vsyncpa [#allocation3], 1
    %284 = vsyncpa [#allocation6], 1
    %285 = vsyncpa [#allocation4], 1

</llo_original>
